<compile_context>
chip_gen: v7x
topology: tpu7x:2x2x1
jax: 0.10.0
libtpu: 0.0.40
codegen_flags: <defaults>
</compile_context>

<pallas_src>
import jax
import jax.numpy as jnp
from jax.experimental import pallas as pl
from jax.experimental.pallas import tpu as pltpu

_BF16 = 2
_F32 = 4


# ----------------------------------------------------------------------------
# Pallas kernels: fused 2-layer MLP box head
# ----------------------------------------------------------------------------
def _mlp_head_kernel_resident(x_ref, w6_ref, b6_ref, w7_ref, b7_ref, o_ref):
    # Weights are VMEM-resident (constant index maps -> DMA'd once per call).
    h = jnp.maximum(
        jnp.dot(x_ref[...], w6_ref[...], preferred_element_type=jnp.float32)
        + b6_ref[...], 0.0)
    y = jnp.dot(h.astype(w7_ref.dtype), w7_ref[...],
                preferred_element_type=jnp.float32)
    o_ref[...] = jnp.maximum(y + b7_ref[...], 0.0).astype(o_ref.dtype)


def _mlp_head_kernel_stream(x_ref, w6_ref, b6_ref, w7_ref, b7_ref, o_ref, acc_ref):
    k = pl.program_id(1)

    part = jnp.dot(x_ref[...], w6_ref[...], preferred_element_type=jnp.float32)

    @pl.when(k == 0)
    def _first():                      # direct write: no zero-init + reload
        acc_ref[...] = part

    @pl.when(k > 0)
    def _accum():
        acc_ref[...] += part

    @pl.when(k == pl.num_programs(1) - 1)
    def _finalize():
        h = jnp.maximum(acc_ref[...] + b6_ref[...], 0.0)          # f32 epilogue (VPU)
        y = jnp.dot(h.astype(w7_ref.dtype), w7_ref[...],
                    preferred_element_type=jnp.float32)            # fc7 (MXU)
        o_ref[...] = jnp.maximum(y + b7_ref[...], 0.0).astype(o_ref.dtype)


# ----------------------------------------------------------------------------
# Tiling plan (hardware-VMEM aware)
# ----------------------------------------------------------------------------
def _round_up(v, m):
    return ((v + m - 1) // m) * m


def _vmem_capacity_bytes():
    try:
        info = pltpu.get_tpu_info()
        cap = getattr(info, "vmem_capacity_bytes", None)
        if cap:
            return int(cap)
    except Exception:
        pass
    return 64 * 1024 * 1024            # conservative default (v7x per-core VMEM)


def _pick_tk(in_dim, tk_max=2048):
    """K tile size + (possibly zero-padded) K extent for the streaming plan."""
    if in_dim <= tk_max:
        return in_dim, in_dim
    pad_k = _round_up(in_dim, 128)     # zero columns contribute nothing to the dot
    tk = 128
    for cand in range(tk_max - (tk_max % 128), 127, -128):
        if pad_k % cand == 0:
            tk = cand
            break
    return tk, pad_k


def _plan_tiling(n, in_dim, rep, out_dim, vmem_cap, force_stream=False):
    budget = int(vmem_cap * 0.70)
    n_pad = _round_up(max(n, 1), 16)   # bf16 sublane packing -> multiple of 16
    bias_bytes = 2 * (rep + out_dim) * _F32

    # --- weight-resident plan (128 MiB parts): weights read from HBM once ------
    if not force_stream:
        w_res = 2 * in_dim * rep * _BF16 + 2 * rep * out_dim * _BF16 + bias_bytes
        per_row = 2 * in_dim * _BF16 + 2 * out_dim * _BF16   # x + out double buffers
        if w_res < budget and (budget - w_res) // per_row >= 16:
            tm_cap = min(1024, ((budget - w_res) // per_row // 16) * 16)
            min_tiles = 2 if n_pad >= 256 else 1    # >=2 M tiles -> both v7x TCs busy
            num_m = max(min_tiles, pl.cdiv(n_pad, tm_cap))
            tm = min(_round_up(pl.cdiv(n_pad, num_m), 16), tm_cap)
            est = w_res + tm * per_row
            return dict(mode="resident", tm=tm, tk=None, pad_k=in_dim, est=est)

    # --- K-streaming plan (64 MiB parts / oversized weights) -------------------
    tk, pad_k = _pick_tk(in_dim)
    fixed = 2 * tk * rep * _BF16 + 2 * rep * out_dim * _BF16 + bias_bytes
    per_row = 2 * tk * _BF16 + rep * _F32 + 2 * out_dim * _BF16
    if budget > fixed and (budget - fixed) // per_row >= 16:
        tm_cap = min(1024, ((budget - fixed) // per_row // 16) * 16)
    else:
        tm_cap = 16
    min_tiles = 2 if n_pad >= 256 else 1
    num_m = max(min_tiles, pl.cdiv(n_pad, tm_cap))
    tm = min(_round_up(pl.cdiv(n_pad, num_m), 16), tm_cap)
    est = fixed + tm * per_row
    return dict(mode="stream", tm=tm, tk=tk, pad_k=pad_k, est=est)


def mlp_head_pallas(x_flat, w6, b6, w7, b7, *, out_dtype=jnp.bfloat16,
                    force_stream=False):
    """x_flat: (num_rois, in_dim). w6: (in_dim, rep), b6: (1, rep),
    w7: (rep, out_dim), b7: (1, out_dim). Returns (num_rois, out_dim)."""
    n, in_dim = x_flat.shape
    rep = w6.shape[1]
    out_dim = w7.shape[1]              # derived from w7 -> half_out works correctly
    assert w7.shape[0] == rep and b6.shape[-1] == rep and b7.shape[-1] == out_dim

    x_bf = x_flat.astype(jnp.bfloat16)       # no-op when pooler already emits bf16
    w6 = w6.astype(jnp.bfloat16)
    w7 = w7.astype(jnp.bfloat16)
    b6 = b6.reshape(1, rep).astype(jnp.float32)
    b7 = b7.reshape(1, out_dim).astype(jnp.float32)

    vmem_cap = _vmem_capacity_bytes()
    plan = _plan_tiling(n, in_dim, rep, out_dim, vmem_cap, force_stream=force_stream)
    tm = plan["tm"]
    vmem_limit = int(min(vmem_cap * 0.9,
                         max(48 << 20, int(plan["est"] * 1.3) + (16 << 20))))
    vmem_limit = max(vmem_limit, 32 << 20)

    if plan["mode"] == "resident":
        # Weights VMEM-resident: grid is just ROI-row tiles; x M-tiles streamed.
        return pl.pallas_call(
            _mlp_head_kernel_resident,
            out_shape=jax.ShapeDtypeStruct((n, out_dim), out_dtype),
            grid=(pl.cdiv(n, tm),),
            in_specs=[
                pl.BlockSpec((tm, in_dim), lambda i: (i, 0)),       # x: stream M tiles
                pl.BlockSpec((in_dim, rep), lambda i: (0, 0)),      # w6: resident
                pl.BlockSpec((1, rep), lambda i: (0, 0)),           # b6: resident
                pl.BlockSpec((rep, out_dim), lambda i: (0, 0)),     # w7: resident
                pl.BlockSpec((1, out_dim), lambda i: (0, 0)),       # b7: resident
            ],
            out_specs=pl.BlockSpec((tm, out_dim), lambda i: (i, 0)),
            compiler_params=pltpu.CompilerParams(
                dimension_semantics=("parallel",),                  # ROI tiles shard TCs
                vmem_limit_bytes=vmem_limit),
        )(x_bf, w6, b6, w7, b7)

    # Streaming plan: pad K to a multiple of 128 if needed (zero columns are inert).
    tk, pad_k = plan["tk"], plan["pad_k"]
    if pad_k != in_dim:
        x_bf = jnp.pad(x_bf, ((0, 0), (0, pad_k - in_dim)))
        w6 = jnp.pad(w6, ((0, pad_k - in_dim), (0, 0)))

    return pl.pallas_call(
        _mlp_head_kernel_stream,
        out_shape=jax.ShapeDtypeStruct((n, out_dim), out_dtype),
        grid=(pl.cdiv(n, tm), pad_k // tk),                         # K last (reduction)
        in_specs=[
            pl.BlockSpec((tm, tk), lambda i, k: (i, k)),            # x: (M, K) tiles
            pl.BlockSpec((tk, rep), lambda i, k: (k, 0)),           # w6: K tiles
            pl.BlockSpec((1, rep), lambda i, k: (0, 0)),            # b6: resident
            pl.BlockSpec((rep, out_dim), lambda i, k: (0, 0)),      # w7: resident
            pl.BlockSpec((1, out_dim), lambda i, k: (0, 0)),        # b7: resident
        ],
        out_specs=pl.BlockSpec((tm, out_dim), lambda i, k: (i, 0)),
        scratch_shapes=[pltpu.VMEM((tm, rep), jnp.float32)],        # fc6 accumulator
        compiler_params=pltpu.CompilerParams(
            dimension_semantics=("parallel", "arbitrary"),
            vmem_limit_bytes=vmem_limit),
    )(x_bf, w6, b6, w7, b7)


# ----------------------------------------------------------------------------
# Pooler (ROIAlign, single FPN level) -- plain JAX glue, gather-free.
# Bilinear sampling + bin averaging is expressed as two small interpolation-
# matrix matmuls per ROI, and the (C,R,R) flatten + bf16 cast are fused here so
# the Pallas MLP kernel consumes a lane-dense bf16 slab with no extra XLA pass.
# ----------------------------------------------------------------------------
def _interp_matrix(coords_raw, size, resolution, sampling_ratio):
    """coords_raw: (R*sr,) raw sample coordinates along one axis.
    Returns (resolution, size) combined bilinear + bin-average matrix."""
    # Legacy maskrcnn-benchmark (aligned=False) edge handling: samples outside
    # [-1, size] contribute zero; in-range coordinates are clamped to [0, size-1].
    valid = ((coords_raw >= -1.0) & (coords_raw <= float(size))).astype(jnp.float32)
    c = jnp.clip(coords_raw, 0.0, float(size - 1))
    c0 = jnp.floor(c)
    frac = c - c0
    c0i = c0.astype(jnp.int32)
    c1i = jnp.minimum(c0i + 1, size - 1)
    grid = jnp.arange(size, dtype=jnp.int32)[None, :]                 # (1, size)
    w = ((grid == c0i[:, None]).astype(jnp.float32) * (1.0 - frac)[:, None]
         + (grid == c1i[:, None]).astype(jnp.float32) * frac[:, None])
    w = w * valid[:, None]
    # Fold the per-bin sampling-point average into the matrix -> (R, size).
    return w.reshape(resolution, sampling_ratio, size).mean(axis=1)


def _roi_align_flat_one(feat_chw, box_xyxy, resolution, spatial_scale, sampling_ratio):
    C, H, W = feat_chw.shape
    x1 = box_xyxy[0] * spatial_scale
    y1 = box_xyxy[1] * spatial_scale
    x2 = box_xyxy[2] * spatial_scale
    y2 = box_xyxy[3] * spatial_scale
    roi_w = jnp.maximum(x2 - x1, 1.0)
    roi_h = jnp.maximum(y2 - y1, 1.0)
    bin_w = roi_w / resolution
    bin_h = roi_h / resolution
    sr = sampling_ratio

    pb = jnp.arange(resolution, dtype=jnp.float32)
    s = jnp.arange(sr, dtype=jnp.float32)
    ys = (y1 + pb[:, None] * bin_h + (s[None, :] + 0.5) * bin_h / sr).reshape(-1)
    xs = (x1 + pb[:, None] * bin_w + (s[None, :] + 0.5) * bin_w / sr).reshape(-1)

    ay = _interp_matrix(ys, H, resolution, sr)            # (R, H)
    ax = _interp_matrix(xs, W, resolution, sr)            # (R, W)
    tmp = jnp.einsum('rh,chw->crw', ay, feat_chw)         # (C, R, W)
    pooled = jnp.einsum('crw,sw->crs', tmp, ax)           # (C, R, R)  NCHW-per-ROI
    # PyTorch-style (C, H, W) flatten + bf16 cast fused into the pooler output.
    return pooled.reshape(C * resolution * resolution).astype(jnp.bfloat16)


def pooler_flat(feature_maps, roi_batch_idx, roi_boxes, resolution, spatial_scale,
                sampling_ratio):
    feats = feature_maps[0]                               # single level, (N, C, H, W)
    # TODO(synk): per-ROI feature selection still materializes one (C,H,W) copy per
    # ROI; the full fix is a Pallas ROIAlign (PrefetchScalarGridSpec with boxes in
    # SMEM + per-ROI window DMA from HBM), kept in JAX here.
    per_roi_feat = feats[roi_batch_idx]                   # (num_rois, C, H, W)
    return jax.vmap(
        lambda f, b: _roi_align_flat_one(f, b, resolution, spatial_scale, sampling_ratio)
    )(per_roi_feat, roi_boxes)                            # (num_rois, C*R*R) bf16


# ----------------------------------------------------------------------------
# ROIBoxFeatureExtractor (concrete, FPN2MLP-style)
# ----------------------------------------------------------------------------
class ROIBoxFeatureExtractorPallas:
    def __init__(self, in_channels, resolution, spatial_scale, sampling_ratio,
                 representation_size, half_out=False, key=jax.random.PRNGKey(0)):
        self.resolution = resolution
        self.spatial_scale = spatial_scale
        self.sampling_ratio = sampling_ratio
        in_dim = in_channels * resolution * resolution
        out_dim = representation_size // 2 if half_out else representation_size
        self.representation_size = out_dim
        k1, k2, k3, k4 = jax.random.split(key, 4)
        # Weights stored transposed vs. PyTorch nn.Linear (y = x @ W + b), in bf16
        # (MXU-native, halves the dominant w6 HBM->VMEM stream). Biases stay f32.
        self.w6 = (jax.random.normal(k1, (in_dim, representation_size), jnp.float32)
                   * 0.02).astype(jnp.bfloat16)
        self.b6 = jax.random.normal(k2, (1, representation_size), jnp.float32) * 0.01
        self.w7 = (jax.random.normal(k3, (representation_size, out_dim), jnp.float32)
                   * 0.02).astype(jnp.bfloat16)
        self.b7 = jax.random.normal(k4, (1, out_dim), jnp.float32) * 0.01

    def forward_without_pool(self, pooled):
        # pooled: (num_rois, C, R, R) -> flatten like torch .view (C, H, W order).
        n = pooled.shape[0]
        flat = pooled.reshape(n, -1)
        return mlp_head_pallas(flat, self.w6, self.b6, self.w7, self.b7)

    def forward(self, feature_maps, roi_batch_idx, roi_boxes):
        flat = pooler_flat(feature_maps, roi_batch_idx, roi_boxes,
                           self.resolution, self.spatial_scale, self.sampling_ratio)
        return mlp_head_pallas(flat, self.w6, self.b6, self.w7, self.b7)


# ----------------------------------------------------------------------------
# Reference (pure jnp, same bf16-multiply / f32-accumulate math) for correctness.
# ----------------------------------------------------------------------------
def _mlp_ref(flat, w6, b6, w7, b7):
    h = jnp.maximum(
        jnp.dot(flat.astype(jnp.bfloat16), w6.astype(jnp.bfloat16),
                preferred_element_type=jnp.float32) + b6, 0.0)
    y = jnp.maximum(
        jnp.dot(h.astype(jnp.bfloat16), w7.astype(jnp.bfloat16),
                preferred_element_type=jnp.float32) + b7, 0.0)
    return y


if __name__ == "__main__":
    key = jax.random.PRNGKey(0)
    kx, kb, kmod = jax.random.split(key, 3)

    # Small synthetic config.
    batch, in_channels, spatial = 2, 4, 16
    resolution, spatial_scale, sampling_ratio = 4, 1.0, 2
    representation_size = 32

    # FeatureMaps: single FPN level, NCHW.
    feat = jax.random.normal(kx, (batch, in_channels, spatial, spatial), jnp.float32)
    feature_maps = [feat]

    # Proposals: 3 boxes per image (x1, y1, x2, y2 in image coords) + batch index.
    raw = jax.random.uniform(kb, (batch * 3, 4), jnp.float32, 1.0, float(spatial) - 1.0)
    x1 = jnp.minimum(raw[:, 0], raw[:, 2]); x2 = jnp.maximum(raw[:, 0], raw[:, 2]) + 1.0
    y1 = jnp.minimum(raw[:, 1], raw[:, 3]); y2 = jnp.maximum(raw[:, 1], raw[:, 3]) + 1.0
    roi_boxes = jnp.stack([x1, y1, x2, y2], axis=1)                 # (6, 4)
    roi_batch_idx = jnp.array([0, 0, 0, 1, 1, 1], jnp.int32)        # (6,)

    extractor = ROIBoxFeatureExtractorPallas(
        in_channels, resolution, spatial_scale, sampling_ratio,
        representation_size, half_out=False, key=kmod)

    out = extractor.forward(feature_maps, roi_batch_idx, roi_boxes)
    out = jax.block_until_ready(out)
    assert out.shape == (6, representation_size), out.shape

    # Verify the Pallas MLP head against the pure-JAX reference (same bf16/f32 math).
    flat = pooler_flat(feature_maps, roi_batch_idx, roi_boxes,
                       resolution, spatial_scale, sampling_ratio)
    ref = _mlp_ref(flat, extractor.w6, extractor.b6, extractor.w7, extractor.b7)
    err = float(jnp.max(jnp.abs(out.astype(jnp.float32) - ref)))
    assert jnp.allclose(out.astype(jnp.float32), ref, atol=1e-2, rtol=2e-2), err

    # Exercise the K-streaming kernel path as well (used when weights exceed VMEM).
    out_stream = jax.block_until_ready(
        mlp_head_pallas(flat, extractor.w6, extractor.b6, extractor.w7, extractor.b7,
                        force_stream=True))
    err_s = float(jnp.max(jnp.abs(out_stream.astype(jnp.float32) - ref)))
    assert jnp.allclose(out_stream.astype(jnp.float32), ref, atol=1e-2, rtol=2e-2), err_s

    # forward_without_pool path (NCHW pooled tensor in, flatten inside).
    pooled_nchw = flat.reshape(6, in_channels, resolution, resolution).astype(jnp.float32)
    out_wp = jax.block_until_ready(extractor.forward_without_pool(pooled_nchw))
    assert out_wp.shape == (6, representation_size), out_wp.shape

    # half_out path (out_dim derived from w7.shape[1]).
    extractor_half = ROIBoxFeatureExtractorPallas(
        in_channels, resolution, spatial_scale, sampling_ratio,
        representation_size, half_out=True, key=kmod)
    out_half = jax.block_until_ready(
        extractor_half.forward(feature_maps, roi_batch_idx, roi_boxes))
    assert out_half.shape == (6, representation_size // 2), out_half.shape

    print("KERNEL_OK")
</pallas_src>

<mosaic_0001>
module attributes {stable_mosaic.version = 11 : i64} {
  func.func @_mlp_head_kernel_resident(%arg0: i32, %arg1: memref<16x64xbf16, #tpu.memory_space<vmem>>, %arg2: memref<64x32xbf16, #tpu.memory_space<vmem>>, %arg3: memref<1x32xf32, #tpu.memory_space<vmem>>, %arg4: memref<32x32xbf16, #tpu.memory_space<vmem>>, %arg5: memref<1x32xf32, #tpu.memory_space<vmem>>, %arg6: memref<16x32xbf16, #tpu.memory_space<vmem>>) attributes {dimension_semantics = [#tpu.dimension_semantics<parallel>], iteration_bounds = array<i64: 1>, scalar_prefetch = 0 : i64, scratch_operands = 0 : i64, tpu.core_type = #tpu.core_type<tc>, window_params = [{transform_indices = @transform_0, window_bounds = array<i64: 16, 64>}, {pipeline_mode = #tpu.pipeline_mode<synchronous>, transform_indices = @transform_1, window_bounds = array<i64: 64, 32>}, {pipeline_mode = #tpu.pipeline_mode<synchronous>, transform_indices = @transform_2, window_bounds = array<i64: 1, 32>}, {pipeline_mode = #tpu.pipeline_mode<synchronous>, transform_indices = @transform_3, window_bounds = array<i64: 32, 32>}, {pipeline_mode = #tpu.pipeline_mode<synchronous>, transform_indices = @transform_4, window_bounds = array<i64: 1, 32>}, {transform_indices = @transform_5, window_bounds = array<i64: 16, 32>}]} {
    %c0 = arith.constant 0 : index
    %c0_0 = arith.constant 0 : index
    %0 = vector.load %arg1[%c0, %c0_0] : memref<16x64xbf16, #tpu.memory_space<vmem>>, vector<16x64xbf16>
    %c0_1 = arith.constant 0 : index
    %c0_2 = arith.constant 0 : index
    %1 = vector.load %arg2[%c0_1, %c0_2] : memref<64x32xbf16, #tpu.memory_space<vmem>>, vector<64x32xbf16>
    %cst = arith.constant dense<0.000000e+00> : vector<16x32xf32>
    %2 = tpu.matmul %0, %1, %cst {dimension_numbers = #tpu.dot_dimension_numbers<[1], [0], [0], [1], [0, 0, 1, 1], [], []>} : vector<16x64xbf16>, vector<64x32xbf16>, vector<16x32xf32> -> vector<16x32xf32>
    %c0_3 = arith.constant 0 : index
    %c0_4 = arith.constant 0 : index
    %3 = vector.load %arg3[%c0_3, %c0_4] : memref<1x32xf32, #tpu.memory_space<vmem>>, vector<1x32xf32>
    %4 = vector.broadcast %3 : vector<1x32xf32> to vector<16x32xf32>
    %5 = arith.addf %2, %4 : vector<16x32xf32>
    %cst_5 = arith.constant 0.000000e+00 : f32
    %6 = vector.broadcast %cst_5 : f32 to vector<16x32xf32>
    %7 = arith.maximumf %5, %6 : vector<16x32xf32>
    %8 = arith.truncf %7 : vector<16x32xf32> to vector<16x32xbf16>
    %c0_6 = arith.constant 0 : index
    %c0_7 = arith.constant 0 : index
    %9 = vector.load %arg4[%c0_6, %c0_7] : memref<32x32xbf16, #tpu.memory_space<vmem>>, vector<32x32xbf16>
    %cst_8 = arith.constant dense<0.000000e+00> : vector<16x32xf32>
    %10 = tpu.matmul %8, %9, %cst_8 {dimension_numbers = #tpu.dot_dimension_numbers<[1], [0], [0], [1], [0, 0, 1, 1], [], []>} : vector<16x32xbf16>, vector<32x32xbf16>, vector<16x32xf32> -> vector<16x32xf32>
    %c0_9 = arith.constant 0 : index
    %c0_10 = arith.constant 0 : index
    %11 = vector.load %arg5[%c0_9, %c0_10] : memref<1x32xf32, #tpu.memory_space<vmem>>, vector<1x32xf32>
    %12 = vector.broadcast %11 : vector<1x32xf32> to vector<16x32xf32>
    %13 = arith.addf %10, %12 : vector<16x32xf32>
    %cst_11 = arith.constant 0.000000e+00 : f32
    %14 = vector.broadcast %cst_11 : f32 to vector<16x32xf32>
    %15 = arith.maximumf %13, %14 : vector<16x32xf32>
    %16 = arith.truncf %15 : vector<16x32xf32> to vector<16x32xbf16>
    %c0_12 = arith.constant 0 : index
    %c0_13 = arith.constant 0 : index
    %17 = vector.load %arg6[%c0_12, %c0_13] : memref<16x32xbf16, #tpu.memory_space<vmem>>, vector<16x32xbf16>
    tpu.vector_store %arg6[%c0_12, %c0_13], %16 {strides = array<i32>} : memref<16x32xbf16, #tpu.memory_space<vmem>>, vector<16x32xbf16>,
    return
  }
  func.func @transform_0(%arg0: i32) -> (i32, i32) {
    %c0_i32 = arith.constant 0 : i32
    %c0_i32_0 = arith.constant 0 : i32
    return %arg0, %c0_i32 : i32, i32
  }
  func.func @transform_1(%arg0: i32) -> (i32, i32) {
    %c0_i32 = arith.constant 0 : i32
    %c0_i32_0 = arith.constant 0 : i32
    %c0_i32_1 = arith.constant 0 : i32
    return %c0_i32, %c0_i32_0 : i32, i32
  }
  func.func @transform_2(%arg0: i32) -> (i32, i32) {
    %c0_i32 = arith.constant 0 : i32
    %c0_i32_0 = arith.constant 0 : i32
    %c0_i32_1 = arith.constant 0 : i32
    return %c0_i32, %c0_i32_0 : i32, i32
  }
  func.func @transform_3(%arg0: i32) -> (i32, i32) {
    %c0_i32 = arith.constant 0 : i32
    %c0_i32_0 = arith.constant 0 : i32
    %c0_i32_1 = arith.constant 0 : i32
    return %c0_i32, %c0_i32_0 : i32, i32
  }
  func.func @transform_4(%arg0: i32) -> (i32, i32) {
    %c0_i32 = arith.constant 0 : i32
    %c0_i32_0 = arith.constant 0 : i32
    %c0_i32_1 = arith.constant 0 : i32
    return %c0_i32, %c0_i32_0 : i32, i32
  }
  func.func @transform_5(%arg0: i32) -> (i32, i32) {
    %c0_i32 = arith.constant 0 : i32
    %c0_i32_0 = arith.constant 0 : i32
    return %arg0, %c0_i32 : i32, i32
  }
}

</mosaic_0001>

<llo_original>
// kernel: tpu_custom_call.1
$region0: #{tpu_custom_call.1}
  #allocation0 [shape = 'u32[]', space=smem, size = 0x4, offset = 0x4, fixed_abs, tag = 'smem constant byte address 0x4 - core index']
  #allocation1 [shape = 'u32[144,128]{1,0:T(1,128)}', space=vmem, size = 0x12000, scoped, tag = 'internal scratch']
  %s0 = inlined_call_operand.vmem [shape: bf16[6,64], index: 0, kind: input, shape index: {}]
  %s1 = inlined_call_operand.vmem [shape: bf16[64,32], index: 1, kind: input, shape index: {}]
  %s2 = inlined_call_operand.vmem [shape: f32[1,32], index: 2, kind: input, shape index: {}]
  %s3 = inlined_call_operand.vmem [shape: bf16[32,32], index: 3, kind: input, shape index: {}]
  %s4 = inlined_call_operand.vmem [shape: f32[1,32], index: 4, kind: input, shape index: {}]
  %s5 = inlined_call_operand.hbm [shape: bf16[6,32], index: 5, kind: output, shape index: {}]
  %s6 = sld [smem:[#allocation0]]
  $region30: #{tpu_custom_call.1} parent=0
    _
  %s8 = ssub.s32 1, %s6
  %s9 = scalar_select 0, %s8, %s6
  $region1: #{tpu_custom_call.1} parent=0
    #allocation2 [shape = 'u8[4096]{0}', space=vmem, size = 0x1000, scoped, tag = 'output window, operand 0, single buffered']
    #allocation3 [shape = 's32[1]{0}', space=sflag, size = 0x4, scoped, tag = 'scoped memory for tpu_custom_call.1']
    %10 = vsyncpa [#allocation3], 0
    // Predicated region
    $region2: #{tpu_custom_call.1} parent=1 // pred_check
      _
    $region3: #{tpu_custom_call.1} parent=1 // pred_check_branch
      %12 = sbr.rel (0) target = $region5
    $region4: #{tpu_custom_call.1} parent=1 // pred_region
      _
    $region5: #{tpu_custom_call.1} parent=1 // pred_fallthru
      _
    // Predicated region
    $region6: #{tpu_custom_call.1} parent=1 // pred_check
      _
    $region7: #{tpu_custom_call.1} parent=1 // pred_check_branch
      %14 = sbr.rel (0) target = $region9
    $region8: #{tpu_custom_call.1} parent=1 // pred_region
      _
    $region9: #{tpu_custom_call.1} parent=1 // pred_fallthru
      _
    // Predicated region
    $region10: #{tpu_custom_call.1} parent=1 // pred_check
      _
    $region11: #{tpu_custom_call.1} parent=1 // pred_check_branch
      %16 = sbr.rel (0) target = $region13
    $region12: #{tpu_custom_call.1} parent=1 // pred_region
      _
    $region13: #{tpu_custom_call.1} parent=1 // pred_fallthru
      _
    // Predicated region
    $region14: #{tpu_custom_call.1} parent=1 // pred_check
      _
    $region15: #{tpu_custom_call.1} parent=1 // pred_check_branch
      %18 = sbr.rel (0) target = $region17
    $region16: #{tpu_custom_call.1} parent=1 // pred_region
      _
    $region17: #{tpu_custom_call.1} parent=1 // pred_fallthru
      _
    // Predicated region
    $region18: #{tpu_custom_call.1} parent=1 // pred_check
      _
    $region19: #{tpu_custom_call.1} parent=1 // pred_check_branch
      %20 = sbr.rel (0) target = $region21
    $region20: #{tpu_custom_call.1} parent=1 // pred_region
      _
    $region21: #{tpu_custom_call.1} parent=1 // pred_fallthru
      _
    %v22 = vld [vmem:[%s0] sm:$0xf]
    %v23 = vld [vmem:[%s0 + $0x4] sm:$0xf]
    %v24 = vld [vmem:[%s1] sm:$0xf]
    %v25 = vld [vmem:[%s1 + $0x4] sm:$0xf]
    %v26 = vld [vmem:[%s1 + $0x8] sm:$0xf]
    %v27 = vld [vmem:[%s1 + $0xc] sm:$0xf]
    %v28 = vld [vmem:[%s1 + $0x10] sm:$0xf]
    %v29 = vld [vmem:[%s1 + $0x14] sm:$0xf]
    %v30 = vld [vmem:[%s1 + $0x18] sm:$0xf]
    %v31 = vld [vmem:[%s1 + $0x1c] sm:$0xf]
    %v32 = vld [vmem:[%s2] sm:$0x1]
    %v34 = vlaneseq
    %v35 = vshrl.u32 %v34, 7
    %v36 = vsub.s32 0, %v35
    %v37 = vrot.slane %v32, %v36
    %v41 = vunpack.c.l.b16 %v22
    %v42 = vunpack.c.l.b16 %v23
    %v43 = vpack.c.b16 %v42, %v41
    %v52 = vunpack.c.l.b16 %v24
    %v53 = vunpack.c.l.b16 %v25
    %v54 = vunpack.c.l.b16 %v26
    %v55 = vunpack.c.l.b16 %v27
    %v56 = vunpack.c.l.b16 %v28
    %v57 = vunpack.c.l.b16 %v29
    %v58 = vunpack.c.l.b16 %v30
    %v59 = vunpack.c.l.b16 %v31
    %v60 = vpack.c.b16 %v53, %v52
    %v61 = vpack.c.b16 %v55, %v54
    %v62 = vpack.c.b16 %v57, %v56
    %v63 = vpack.c.b16 %v59, %v58
    %vm68 = vcmask 523264
    %v70 = vsel %vm68, %v43, 0
    %72 = vmatprep.subr.bf16.mxu0 0
    %73 = vmatpush1.bf16.msra.mxu0 %v60
    %74 = vmatprep.subr.bf16.mxu0 0
    %75 = vmatpush1.bf16.msra.mxu0 %v61
    %76 = vmatprep.subr.bf16.mxu0 0
    %77 = vmatpush1.bf16.msra.mxu0 %v62
    %78 = vmatprep.subr.bf16.mxu0 0
    %79 = vmatpush1.bf16.msra.mxu0 %v63
    %80 = vmatprep.subr.bf16.mxu0 0
    %81 = vmatpush1.bf16.msra.mxu0 0
    %82 = vmatprep.subr.bf16.mxu0 0
    %83 = vmatpush1.bf16.msra.mxu0 0
    %84 = vmatprep.subr.bf16.mxu0 0
    %85 = vmatpush1.bf16.msra.mxu0 0
    %86 = vmatprep.subr.bf16.mxu0 0
    %87 = vmatpush1.bf16.msra.mxu0 0
    %88 = vmatprep.subr.bf16.mxu0 0
    %89 = vmatpush1.bf16.msra.mxu0 0
    %90 = vmatprep.subr.bf16.mxu0 0
    %91 = vmatpush1.bf16.msra.mxu0 0
    %92 = vmatprep.subr.bf16.mxu0 0
    %93 = vmatpush1.bf16.msra.mxu0 0
    %94 = vmatprep.subr.bf16.mxu0 0
    %95 = vmatpush1.bf16.msra.mxu0 0
    %96 = vmatprep.subr.bf16.mxu0 0
    %97 = vmatpush1.bf16.msra.mxu0 0
    %98 = vmatprep.subr.bf16.mxu0 0
    %99 = vmatpush1.bf16.msra.mxu0 0
    %100 = vmatprep.subr.bf16.mxu0 0
    %101 = vmatpush1.bf16.msra.mxu0 0
    %102 = vmatprep.subr.bf16.mxu0 0
    %103 = vmatpush1.bf16.msra.mxu0 0
    %104 = vmatprep.mubr.bf16.mxu0 0
    %105 = vmatmul.mubr.bf16.gmra.mrb[0].mxu0 %v70
    %v106 = vpop.f32.mrb[0].mxu0
    %v107 = vadd.f32 %v37, %v106
    %v108 = vpop.f32.mrb[0].mxu0
    %v109 = vpop.f32.mrb[0].mxu0
    %v110 = vadd.f32 %v37, %v109
    %v111 = vpop.f32.mrb[0].mxu0
    %112 = vdwg.mxu0
    %v113 = vmax.f32 %v107, 0.0
    %v114 = vmax.f32 %v110, 0.0
    %v115 = vpack.c.bf16 %v114, %v113
    %v116 = vld [vmem:[%s3] sm:$0xf]
    %v117 = vld [vmem:[%s3 + $0x4] sm:$0xf]
    %v118 = vld [vmem:[%s3 + $0x8] sm:$0xf]
    %v119 = vld [vmem:[%s3 + $0xc] sm:$0xf]
    %v120 = vld [vmem:[%s4] sm:$0x1]
    %v122 = vlaneseq
    %v123 = vshrl.u32 %v122, 7
    %v124 = vsub.s32 0, %v123
    %v125 = vrot.slane %v120, %v124
    %v131 = vunpack.c.l.b16 %v116
    %v132 = vunpack.c.l.b16 %v117
    %v133 = vunpack.c.l.b16 %v118
    %v134 = vunpack.c.l.b16 %v119
    %v135 = vpack.c.b16 %v132, %v131
    %v136 = vpack.c.b16 %v134, %v133
    %vm139 = vcmask 261120
    %v141 = vsel %vm139, %v115, 0
    %143 = vmatprep.subr.bf16.mxu0 0
    %144 = vmatpush1.bf16.msra.mxu0 %v135
    %145 = vmatprep.subr.bf16.mxu0 0
    %146 = vmatpush1.bf16.msra.mxu0 %v136
    %147 = vmatprep.subr.bf16.mxu0 0
    %148 = vmatpush1.bf16.msra.mxu0 0
    %149 = vmatprep.subr.bf16.mxu0 0
    %150 = vmatpush1.bf16.msra.mxu0 0
    %151 = vmatprep.subr.bf16.mxu0 0
    %152 = vmatpush1.bf16.msra.mxu0 0
    %153 = vmatprep.subr.bf16.mxu0 0
    %154 = vmatpush1.bf16.msra.mxu0 0
    %155 = vmatprep.subr.bf16.mxu0 0
    %156 = vmatpush1.bf16.msra.mxu0 0
    %157 = vmatprep.subr.bf16.mxu0 0
    %158 = vmatpush1.bf16.msra.mxu0 0
    %159 = vmatprep.subr.bf16.mxu0 0
    %160 = vmatpush1.bf16.msra.mxu0 0
    %161 = vmatprep.subr.bf16.mxu0 0
    %162 = vmatpush1.bf16.msra.mxu0 0
    %163 = vmatprep.subr.bf16.mxu0 0
    %164 = vmatpush1.bf16.msra.mxu0 0
    %165 = vmatprep.subr.bf16.mxu0 0
    %166 = vmatpush1.bf16.msra.mxu0 0
    %167 = vmatprep.subr.bf16.mxu0 0
    %168 = vmatpush1.bf16.msra.mxu0 0
    %169 = vmatprep.subr.bf16.mxu0 0
    %170 = vmatpush1.bf16.msra.mxu0 0
    %171 = vmatprep.subr.bf16.mxu0 0
    %172 = vmatpush1.bf16.msra.mxu0 0
    %173 = vmatprep.subr.bf16.mxu0 0
    %174 = vmatpush1.bf16.msra.mxu0 0
    %175 = vmatprep.mubr.bf16.mxu0 0
    %176 = vmatmul.mubr.bf16.gmra.mrb[0].mxu0 %v141
    %v177 = vpop.f32.mrb[0].mxu0
    %v178 = vadd.f32 %v125, %v177
    %v179 = vpop.f32.mrb[0].mxu0
    %v180 = vpop.f32.mrb[0].mxu0
    %v181 = vadd.f32 %v125, %v180
    %v182 = vpop.f32.mrb[0].mxu0
    %183 = vdwg.mxu0
    %v184 = vmax.f32 %v178, 0.0
    %v185 = vmax.f32 %v181, 0.0
    %v186 = vpack.c.bf16 %v185, %v184
    %v188 = vunpack.c.l.b16 %v186
    %v189 = vunpack.c.h.b16 %v186
    %v190 = vpack.c.b16 %v188, %v188
    %v191 = vpack.c.b16 %v189, %v189
    %vm194 = vcmask 257024
    %195 = vst.msk [vmem:[#allocation2] sm:$0xf] %vm194, %v190
    %196 = vst.msk [vmem:[#allocation2 + $0x4] sm:$0xf] %vm194, %v191
    // Predicated region
    $region22: #{tpu_custom_call.1} parent=1 // pred_check
      _
    $region23: #{tpu_custom_call.1} parent=1 // pred_check_branch
      %198 = sbr.rel (0) target = $region25
    $region24: #{tpu_custom_call.1} parent=1 // pred_region
      %s200 = ssub.s32 128, 64
      %201 = vsyncadd [#allocation3], %s200
      %s202 = sshll.u32 [#allocation2], 4
      %s203 = int_to_ptr.vmem [resolvable:$true] %s202
      %208 = dma.vmem_to_hbm [thread:$0]  %s203, 64, %s5, [#allocation3], 64, 64, 4
    $region25: #{tpu_custom_call.1} parent=1 // pred_fallthru
      _
    // Predicated region
    $region26: #{tpu_custom_call.1} parent=1 // pred_check
      _
    $region27: #{tpu_custom_call.1} parent=1 // pred_check_branch
      %210 = sbr.rel (0) target = $region29
    $region28: #{tpu_custom_call.1} parent=1 // pred_region
      %211 = dma.done [#allocation3], 128
    $region29: #{tpu_custom_call.1} parent=1 // pred_fallthru
      _
    %212 = vsyncpa [#allocation3], 1

</llo_original>
